<compile_context>
chip_gen: v5e
topology: v5e:2x2
jax: 0.10.0
libtpu: 0.0.40
codegen_flags: <defaults>
</compile_context>

<pallas_src>
import jax
import jax.numpy as jnp
from jax.experimental import pallas as pl
from jax.experimental.pallas import tpu as pltpu

LAYER_DIMS = [(2, 16), (16, 32), (32, 64), (64, 128), (128, 784)]
IN_DIM = LAYER_DIMS[0][0]          # 2
OUT_DIM = LAYER_DIMS[-1][1]        # 784

SUBLANE = 8
# Lane-dense padded dims: hidden widths -> 128, final 784 -> 896 (= 7 * 128).
PADDED_DIMS = [(IN_DIM, 128), (128, 128), (128, 128), (128, 128), (128, 896)]
OUT_DIM_PAD = PADDED_DIMS[-1][1]   # 896

# Rows per grid step. 1024 rows => ~3.5 MB f32 output tile (x2 buffers) plus
# ~320 KB of bf16 weights and ~0.5 MB intermediates: well under the 32 MiB
# scoped-VMEM default and safe on v7x's 64 MiB physical VMEM.
TILE_B_MAX = 1024


def _round_up(x, m):
    return ((x + m - 1) // m) * m


def generator_mlp_kernel(x_ref,
                         w1_ref, b1_ref, w2_ref, b2_ref, w3_ref, b3_ref,
                         w4_ref, b4_ref, w5_ref, b5_ref,
                         out_ref):
    """Fused 5-layer MLP. Weights stay VMEM-resident across the batch grid."""

    def dense(h, w_ref, b_ref):
        # bf16 operands on the MXU, f32 accumulation; bias-add stays in f32.
        return jnp.dot(h.astype(w_ref.dtype), w_ref[...],
                       preferred_element_type=jnp.float32) + b_ref[...]

    h = x_ref[...]                                     # [TILE_B, 2] f32
    h = jnp.maximum(dense(h, w1_ref, b1_ref), 0.0)     # [TILE_B, 128]
    h = jnp.maximum(dense(h, w2_ref, b2_ref), 0.0)
    h = jnp.maximum(dense(h, w3_ref, b3_ref), 0.0)
    h = jnp.maximum(dense(h, w4_ref, b4_ref), 0.0)
    out_ref[...] = dense(h, w5_ref, b5_ref)            # [TILE_B, 896], no act.


def init_generator_params(key):
    """PyTorch-style uniform(+/- 1/sqrt(fan_in)) init; weights as [in, out]."""
    params = []
    for (fan_in, fan_out) in LAYER_DIMS:
        key, kw, kb = jax.random.split(key, 3)
        bound = 1.0 / jnp.sqrt(float(fan_in))
        w = jax.random.uniform(kw, (fan_in, fan_out), jnp.float32, -bound, bound)
        b = jax.random.uniform(kb, (1, fan_out), jnp.float32, -bound, bound)
        params.append((w, b))
    return params


def prepare_params(params, weight_dtype=jnp.bfloat16):
    """Zero-pad to lane-dense shapes; weights -> bf16, biases stay f32.

    Zero padding is mathematically exact: padded output columns stay zero
    through the ReLUs and padded input rows only ever multiply those zeros.
    """
    prepared = []
    for (w, b), (pin, pout) in zip(params, PADDED_DIMS):
        fan_in, fan_out = w.shape
        wp = jnp.zeros((pin, pout), jnp.float32).at[:fan_in, :fan_out].set(w)
        bp = jnp.zeros((1, pout), jnp.float32).at[:, :fan_out].set(b)
        prepared.append((wp.astype(weight_dtype), bp))
    return prepared


@jax.jit
def generator_forward(x, prepared_params):
    batch = x.shape[0]
    tile_b = min(TILE_B_MAX, _round_up(batch, SUBLANE))
    padded_batch = _round_up(batch, tile_b)
    if padded_batch != batch:
        x = jnp.pad(x, ((0, padded_batch - batch), (0, 0)))
    grid = (padded_batch // tile_b,)

    flat_params = []
    in_specs = [pl.BlockSpec((tile_b, IN_DIM), lambda i: (i, 0))]
    for (w, b) in prepared_params:
        flat_params += [w, b]
        # Constant block index -> weights/biases remain resident in VMEM.
        in_specs.append(pl.BlockSpec(w.shape, lambda i: (0, 0)))
        in_specs.append(pl.BlockSpec(b.shape, lambda i: (0, 0)))
    out_spec = pl.BlockSpec((tile_b, OUT_DIM_PAD), lambda i: (i, 0))

    weight_bytes = sum(w.size * w.dtype.itemsize + b.size * b.dtype.itemsize
                       for (w, b) in prepared_params)
    flops = 2 * padded_batch * sum(pin * pout for (pin, pout) in PADDED_DIMS)
    bytes_accessed = (padded_batch * IN_DIM * 4
                      + padded_batch * OUT_DIM_PAD * 4
                      + weight_bytes)

    out_padded = pl.pallas_call(
        generator_mlp_kernel,
        out_shape=jax.ShapeDtypeStruct((padded_batch, OUT_DIM_PAD), jnp.float32),
        grid=grid,
        in_specs=in_specs,
        out_specs=out_spec,
        compiler_params=pltpu.CompilerParams(
            dimension_semantics=("parallel",)),
        cost_estimate=pl.CostEstimate(
            flops=flops, transcendentals=0, bytes_accessed=bytes_accessed),
    )(x, *flat_params)

    # Strip batch padding and the 896 -> 784 lane padding.
    return out_padded[:batch, :OUT_DIM]


def reference_forward(x, prepared_params):
    """Pure-JAX reference replicating the kernel math (bf16 operands, f32 acc)."""
    h = x
    for i, (w, b) in enumerate(prepared_params):
        h = jnp.dot(h.astype(w.dtype), w, preferred_element_type=jnp.float32) + b
        if i < len(prepared_params) - 1:
            h = jnp.maximum(h, 0.0)
    return h[:, :OUT_DIM]


if __name__ == "__main__":
    key = jax.random.PRNGKey(0)
    key, k_x = jax.random.split(key)

    batch = 8
    # Generator('cnn') takes a 2-D latent code per sample: x is [batch, 2].
    x = jax.random.normal(k_x, (batch, IN_DIM), dtype=jnp.float32)

    params = init_generator_params(key)
    prepared = prepare_params(params)

    out = jax.block_until_ready(generator_forward(x, prepared))
    assert out.shape == (batch, OUT_DIM), out.shape

    ref = reference_forward(x, prepared)
    max_err = float(jnp.max(jnp.abs(out - ref)))
    assert jnp.allclose(out, ref, atol=2e-3, rtol=2e-3), max_err

    print("KERNEL_OK")
</pallas_src>

<mosaic_0001>
module attributes {stable_mosaic.version = 11 : i64} {
  func.func @generator_mlp_kernel(%arg0: i32, %arg1: memref<8x2xf32, #tpu.memory_space<vmem>>, %arg2: memref<2x128xbf16, #tpu.memory_space<vmem>>, %arg3: memref<1x128xf32, #tpu.memory_space<vmem>>, %arg4: memref<128x128xbf16, #tpu.memory_space<vmem>>, %arg5: memref<1x128xf32, #tpu.memory_space<vmem>>, %arg6: memref<128x128xbf16, #tpu.memory_space<vmem>>, %arg7: memref<1x128xf32, #tpu.memory_space<vmem>>, %arg8: memref<128x128xbf16, #tpu.memory_space<vmem>>, %arg9: memref<1x128xf32, #tpu.memory_space<vmem>>, %arg10: memref<128x896xbf16, #tpu.memory_space<vmem>>, %arg11: memref<1x896xf32, #tpu.memory_space<vmem>>, %arg12: memref<8x896xf32, #tpu.memory_space<vmem>>) attributes {dimension_semantics = [#tpu.dimension_semantics<parallel>], iteration_bounds = array<i64: 1>, scalar_prefetch = 0 : i64, scratch_operands = 0 : i64, tpu.core_type = #tpu.core_type<tc>, window_params = [{transform_indices = @transform_0, window_bounds = array<i64: 8, 2>}, {pipeline_mode = #tpu.pipeline_mode<synchronous>, transform_indices = @transform_1, window_bounds = array<i64: 2, 128>}, {pipeline_mode = #tpu.pipeline_mode<synchronous>, transform_indices = @transform_2, window_bounds = array<i64: 1, 128>}, {pipeline_mode = #tpu.pipeline_mode<synchronous>, transform_indices = @transform_3, window_bounds = array<i64: 128, 128>}, {pipeline_mode = #tpu.pipeline_mode<synchronous>, transform_indices = @transform_4, window_bounds = array<i64: 1, 128>}, {pipeline_mode = #tpu.pipeline_mode<synchronous>, transform_indices = @transform_5, window_bounds = array<i64: 128, 128>}, {pipeline_mode = #tpu.pipeline_mode<synchronous>, transform_indices = @transform_6, window_bounds = array<i64: 1, 128>}, {pipeline_mode = #tpu.pipeline_mode<synchronous>, transform_indices = @transform_7, window_bounds = array<i64: 128, 128>}, {pipeline_mode = #tpu.pipeline_mode<synchronous>, transform_indices = @transform_8, window_bounds = array<i64: 1, 128>}, {pipeline_mode = #tpu.pipeline_mode<synchronous>, transform_indices = @transform_9, window_bounds = array<i64: 128, 896>}, {pipeline_mode = #tpu.pipeline_mode<synchronous>, transform_indices = @transform_10, window_bounds = array<i64: 1, 896>}, {transform_indices = @transform_11, window_bounds = array<i64: 8, 896>}]} {
    %c0 = arith.constant 0 : index
    %c0_0 = arith.constant 0 : index
    %0 = vector.load %arg1[%c0, %c0_0] : memref<8x2xf32, #tpu.memory_space<vmem>>, vector<8x2xf32>
    %1 = arith.truncf %0 : vector<8x2xf32> to vector<8x2xbf16>
    %c0_1 = arith.constant 0 : index
    %c0_2 = arith.constant 0 : index
    %2 = vector.load %arg2[%c0_1, %c0_2] : memref<2x128xbf16, #tpu.memory_space<vmem>>, vector<2x128xbf16>
    %cst = arith.constant dense<0.000000e+00> : vector<8x128xf32>
    %3 = tpu.matmul %1, %2, %cst {dimension_numbers = #tpu.dot_dimension_numbers<[1], [0], [0], [1], [0, 0, 1, 1], [], []>} : vector<8x2xbf16>, vector<2x128xbf16>, vector<8x128xf32> -> vector<8x128xf32>
    %c0_3 = arith.constant 0 : index
    %c0_4 = arith.constant 0 : index
    %4 = vector.load %arg3[%c0_3, %c0_4] : memref<1x128xf32, #tpu.memory_space<vmem>>, vector<1x128xf32>
    %5 = vector.broadcast %4 : vector<1x128xf32> to vector<8x128xf32>
    %6 = arith.addf %3, %5 : vector<8x128xf32>
    %cst_5 = arith.constant 0.000000e+00 : f32
    %7 = vector.broadcast %cst_5 : f32 to vector<8x128xf32>
    %8 = arith.maximumf %6, %7 : vector<8x128xf32>
    %9 = arith.truncf %8 : vector<8x128xf32> to vector<8x128xbf16>
    %c0_6 = arith.constant 0 : index
    %c0_7 = arith.constant 0 : index
    %10 = vector.load %arg4[%c0_6, %c0_7] : memref<128x128xbf16, #tpu.memory_space<vmem>>, vector<128x128xbf16>
    %cst_8 = arith.constant dense<0.000000e+00> : vector<8x128xf32>
    %11 = tpu.matmul %9, %10, %cst_8 {dimension_numbers = #tpu.dot_dimension_numbers<[1], [0], [0], [1], [0, 0, 1, 1], [], []>} : vector<8x128xbf16>, vector<128x128xbf16>, vector<8x128xf32> -> vector<8x128xf32>
    %c0_9 = arith.constant 0 : index
    %c0_10 = arith.constant 0 : index
    %12 = vector.load %arg5[%c0_9, %c0_10] : memref<1x128xf32, #tpu.memory_space<vmem>>, vector<1x128xf32>
    %13 = vector.broadcast %12 : vector<1x128xf32> to vector<8x128xf32>
    %14 = arith.addf %11, %13 : vector<8x128xf32>
    %cst_11 = arith.constant 0.000000e+00 : f32
    %15 = vector.broadcast %cst_11 : f32 to vector<8x128xf32>
    %16 = arith.maximumf %14, %15 : vector<8x128xf32>
    %17 = arith.truncf %16 : vector<8x128xf32> to vector<8x128xbf16>
    %c0_12 = arith.constant 0 : index
    %c0_13 = arith.constant 0 : index
    %18 = vector.load %arg6[%c0_12, %c0_13] : memref<128x128xbf16, #tpu.memory_space<vmem>>, vector<128x128xbf16>
    %cst_14 = arith.constant dense<0.000000e+00> : vector<8x128xf32>
    %19 = tpu.matmul %17, %18, %cst_14 {dimension_numbers = #tpu.dot_dimension_numbers<[1], [0], [0], [1], [0, 0, 1, 1], [], []>} : vector<8x128xbf16>, vector<128x128xbf16>, vector<8x128xf32> -> vector<8x128xf32>
    %c0_15 = arith.constant 0 : index
    %c0_16 = arith.constant 0 : index
    %20 = vector.load %arg7[%c0_15, %c0_16] : memref<1x128xf32, #tpu.memory_space<vmem>>, vector<1x128xf32>
    %21 = vector.broadcast %20 : vector<1x128xf32> to vector<8x128xf32>
    %22 = arith.addf %19, %21 : vector<8x128xf32>
    %cst_17 = arith.constant 0.000000e+00 : f32
    %23 = vector.broadcast %cst_17 : f32 to vector<8x128xf32>
    %24 = arith.maximumf %22, %23 : vector<8x128xf32>
    %25 = arith.truncf %24 : vector<8x128xf32> to vector<8x128xbf16>
    %c0_18 = arith.constant 0 : index
    %c0_19 = arith.constant 0 : index
    %26 = vector.load %arg8[%c0_18, %c0_19] : memref<128x128xbf16, #tpu.memory_space<vmem>>, vector<128x128xbf16>
    %cst_20 = arith.constant dense<0.000000e+00> : vector<8x128xf32>
    %27 = tpu.matmul %25, %26, %cst_20 {dimension_numbers = #tpu.dot_dimension_numbers<[1], [0], [0], [1], [0, 0, 1, 1], [], []>} : vector<8x128xbf16>, vector<128x128xbf16>, vector<8x128xf32> -> vector<8x128xf32>
    %c0_21 = arith.constant 0 : index
    %c0_22 = arith.constant 0 : index
    %28 = vector.load %arg9[%c0_21, %c0_22] : memref<1x128xf32, #tpu.memory_space<vmem>>, vector<1x128xf32>
    %29 = vector.broadcast %28 : vector<1x128xf32> to vector<8x128xf32>
    %30 = arith.addf %27, %29 : vector<8x128xf32>
    %cst_23 = arith.constant 0.000000e+00 : f32
    %31 = vector.broadcast %cst_23 : f32 to vector<8x128xf32>
    %32 = arith.maximumf %30, %31 : vector<8x128xf32>
    %33 = arith.truncf %32 : vector<8x128xf32> to vector<8x128xbf16>
    %c0_24 = arith.constant 0 : index
    %c0_25 = arith.constant 0 : index
    %34 = vector.load %arg10[%c0_24, %c0_25] : memref<128x896xbf16, #tpu.memory_space<vmem>>, vector<128x896xbf16>
    %cst_26 = arith.constant dense<0.000000e+00> : vector<8x896xf32>
    %35 = tpu.matmul %33, %34, %cst_26 {dimension_numbers = #tpu.dot_dimension_numbers<[1], [0], [0], [1], [0, 0, 1, 1], [], []>} : vector<8x128xbf16>, vector<128x896xbf16>, vector<8x896xf32> -> vector<8x896xf32>
    %c0_27 = arith.constant 0 : index
    %c0_28 = arith.constant 0 : index
    %36 = vector.load %arg11[%c0_27, %c0_28] : memref<1x896xf32, #tpu.memory_space<vmem>>, vector<1x896xf32>
    %37 = vector.broadcast %36 : vector<1x896xf32> to vector<8x896xf32>
    %38 = arith.addf %35, %37 : vector<8x896xf32>
    %c0_29 = arith.constant 0 : index
    %c0_30 = arith.constant 0 : index
    %39 = vector.load %arg12[%c0_29, %c0_30] : memref<8x896xf32, #tpu.memory_space<vmem>>, vector<8x896xf32>
    tpu.vector_store %arg12[%c0_29, %c0_30], %38 {strides = array<i32>} : memref<8x896xf32, #tpu.memory_space<vmem>>, vector<8x896xf32>,
    return
  }
  func.func @transform_0(%arg0: i32) -> (i32, i32) {
    %c0_i32 = arith.constant 0 : i32
    %c0_i32_0 = arith.constant 0 : i32
    return %arg0, %c0_i32 : i32, i32
  }
  func.func @transform_1(%arg0: i32) -> (i32, i32) {
    %c0_i32 = arith.constant 0 : i32
    %c0_i32_0 = arith.constant 0 : i32
    %c0_i32_1 = arith.constant 0 : i32
    return %c0_i32, %c0_i32_0 : i32, i32
  }
  func.func @transform_2(%arg0: i32) -> (i32, i32) {
    %c0_i32 = arith.constant 0 : i32
    %c0_i32_0 = arith.constant 0 : i32
    %c0_i32_1 = arith.constant 0 : i32
    return %c0_i32, %c0_i32_0 : i32, i32
  }
  func.func @transform_3(%arg0: i32) -> (i32, i32) {
    %c0_i32 = arith.constant 0 : i32
    %c0_i32_0 = arith.constant 0 : i32
    %c0_i32_1 = arith.constant 0 : i32
    return %c0_i32, %c0_i32_0 : i32, i32
  }
  func.func @transform_4(%arg0: i32) -> (i32, i32) {
    %c0_i32 = arith.constant 0 : i32
    %c0_i32_0 = arith.constant 0 : i32
    %c0_i32_1 = arith.constant 0 : i32
    return %c0_i32, %c0_i32_0 : i32, i32
  }
  func.func @transform_5(%arg0: i32) -> (i32, i32) {
    %c0_i32 = arith.constant 0 : i32
    %c0_i32_0 = arith.constant 0 : i32
    %c0_i32_1 = arith.constant 0 : i32
    return %c0_i32, %c0_i32_0 : i32, i32
  }
  func.func @transform_6(%arg0: i32) -> (i32, i32) {
    %c0_i32 = arith.constant 0 : i32
    %c0_i32_0 = arith.constant 0 : i32
    %c0_i32_1 = arith.constant 0 : i32
    return %c0_i32, %c0_i32_0 : i32, i32
  }
  func.func @transform_7(%arg0: i32) -> (i32, i32) {
    %c0_i32 = arith.constant 0 : i32
    %c0_i32_0 = arith.constant 0 : i32
    %c0_i32_1 = arith.constant 0 : i32
    return %c0_i32, %c0_i32_0 : i32, i32
  }
  func.func @transform_8(%arg0: i32) -> (i32, i32) {
    %c0_i32 = arith.constant 0 : i32
    %c0_i32_0 = arith.constant 0 : i32
    %c0_i32_1 = arith.constant 0 : i32
    return %c0_i32, %c0_i32_0 : i32, i32
  }
  func.func @transform_9(%arg0: i32) -> (i32, i32) {
    %c0_i32 = arith.constant 0 : i32
    %c0_i32_0 = arith.constant 0 : i32
    %c0_i32_1 = arith.constant 0 : i32
    return %c0_i32, %c0_i32_0 : i32, i32
  }
  func.func @transform_10(%arg0: i32) -> (i32, i32) {
    %c0_i32 = arith.constant 0 : i32
    %c0_i32_0 = arith.constant 0 : i32
    %c0_i32_1 = arith.constant 0 : i32
    return %c0_i32, %c0_i32_0 : i32, i32
  }
  func.func @transform_11(%arg0: i32) -> (i32, i32) {
    %c0_i32 = arith.constant 0 : i32
    %c0_i32_0 = arith.constant 0 : i32
    return %arg0, %c0_i32 : i32, i32
  }
}

</mosaic_0001>

<llo_original>
// kernel: generator_forward.1
$region0: #{generator_forward.1}
  #allocation0 [shape = 'u32[]', space=smem, size = 0x4, offset = 0x4, fixed_abs, tag = 'smem constant byte address 0x4 - core index']
  #allocation1 [shape = 'u32[72,128]{1,0:T(1,128)}', space=vmem, size = 0x9000, scoped, tag = 'internal scratch']
  %s0 = inlined_call_operand.vmem [shape: f32[8,2], index: 0, kind: input, shape index: {}]
  %s1 = inlined_call_operand.vmem [shape: bf16[2,128], index: 1, kind: input, shape index: {}]
  %s2 = inlined_call_operand.vmem [shape: f32[1,128], index: 2, kind: input, shape index: {}]
  %s3 = inlined_call_operand.hbm [shape: bf16[128,128], index: 3, kind: input, shape index: {}]
  %s4 = inlined_call_operand.vmem [shape: f32[1,128], index: 4, kind: input, shape index: {}]
  %s5 = inlined_call_operand.hbm [shape: bf16[128,128], index: 5, kind: input, shape index: {}]
  %s6 = inlined_call_operand.vmem [shape: f32[1,128], index: 6, kind: input, shape index: {}]
  %s7 = inlined_call_operand.hbm [shape: bf16[128,128], index: 7, kind: input, shape index: {}]
  %s8 = inlined_call_operand.vmem [shape: f32[1,128], index: 8, kind: input, shape index: {}]
  %s9 = inlined_call_operand.hbm [shape: bf16[128,896], index: 9, kind: input, shape index: {}]
  %s10 = inlined_call_operand.vmem [shape: f32[1,896], index: 10, kind: input, shape index: {}]
  %s11 = inlined_call_operand.hbm [shape: f32[8,896], index: 11, kind: output, shape index: {}]
  %s12 = sld [smem:[#allocation0]]
  $region70: #{generator_forward.1} parent=0
    _
  %s14 = ssub.s32 1, %s12
  %s15 = scalar_select 0, %s14, %s12
  $region1: #{generator_forward.1} parent=0
    #allocation2 [shape = 'u8[32768]{0}', space=vmem, size = 0x8000, scoped, tag = 'input window, operand 3, single buffered']
    #allocation3 [shape = 's32[1]{0}', space=sflag, size = 0x4, scoped, tag = 'scoped memory for generator_forward.1']
    #allocation4 [shape = 's32[1]{0}', space=sflag, size = 0x4, scoped, tag = 'scoped memory for generator_forward.1']
    #allocation5 [shape = 'u8[32768]{0}', space=vmem, size = 0x8000, scoped, tag = 'input window, operand 5, single buffered']
    #allocation6 [shape = 's32[1]{0}', space=sflag, size = 0x4, scoped, tag = 'scoped memory for generator_forward.1']
    #allocation7 [shape = 'u8[32768]{0}', space=vmem, size = 0x8000, scoped, tag = 'input window, operand 7, single buffered']
    #allocation8 [shape = 'u8[229376]{0}', space=vmem, size = 0x38000, scoped, tag = 'input window, operand 9, single buffered']
    #allocation9 [shape = 's32[1]{0}', space=sflag, size = 0x4, scoped, tag = 'scoped memory for generator_forward.1']
    #allocation10 [shape = 'u8[28672]{0}', space=vmem, size = 0x7000, scoped, tag = 'output window, operand 0, single buffered']
    %16 = vsyncpa [#allocation3], 0
    %17 = vsyncpa [#allocation6], 0
    %18 = vsyncpa [#allocation9], 0
    %19 = vsyncpa [#allocation4], 0
    // Predicated region
    $region2: #{generator_forward.1} parent=1 // pred_check
      _
    $region3: #{generator_forward.1} parent=1 // pred_check_branch
      %21 = sbr.rel (0) target = $region5
    $region4: #{generator_forward.1} parent=1 // pred_region
      _
    $region5: #{generator_forward.1} parent=1 // pred_fallthru
      _
    // Predicated region
    $region6: #{generator_forward.1} parent=1 // pred_check
      _
    $region7: #{generator_forward.1} parent=1 // pred_check_branch
      %23 = sbr.rel (0) target = $region9
    $region8: #{generator_forward.1} parent=1 // pred_region
      _
    $region9: #{generator_forward.1} parent=1 // pred_fallthru
      _
    // Predicated region
    $region10: #{generator_forward.1} parent=1 // pred_check
      _
    $region11: #{generator_forward.1} parent=1 // pred_check_branch
      %25 = sbr.rel (0) target = $region13
    $region12: #{generator_forward.1} parent=1 // pred_region
      _
    $region13: #{generator_forward.1} parent=1 // pred_fallthru
      _
    // Predicated region
    $region14: #{generator_forward.1} parent=1 // pred_check
      _
    $region15: #{generator_forward.1} parent=1 // pred_check_branch
      %27 = sbr.rel (0) target = $region17
    $region16: #{generator_forward.1} parent=1 // pred_region
      %29 = vsyncadd [#allocation3], 0
      %s30 = sshll.u32 %s3, 4
      %s31 = int_to_ptr.hbm [resolvable:$true] %s30
      %s32 = sshll.u32 [#allocation2], 4
      %s33 = int_to_ptr.vmem [resolvable:$true] %s32
      %38 = dma.hbm_to_vmem [thread:$0]  %s31, 1024, %s33, [#allocation3], 64, 64, 4
    $region17: #{generator_forward.1} parent=1 // pred_fallthru
      _
    // Predicated region
    $region18: #{generator_forward.1} parent=1 // pred_check
      _
    $region19: #{generator_forward.1} parent=1 // pred_check_branch
      %40 = sbr.rel (0) target = $region21
    $region20: #{generator_forward.1} parent=1 // pred_region
      _
    $region21: #{generator_forward.1} parent=1 // pred_fallthru
      _
    // Predicated region
    $region22: #{generator_forward.1} parent=1 // pred_check
      _
    $region23: #{generator_forward.1} parent=1 // pred_check_branch
      %42 = sbr.rel (0) target = $region25
    $region24: #{generator_forward.1} parent=1 // pred_region
      %44 = vsyncadd [#allocation6], 0
      %s45 = sshll.u32 %s5, 4
      %s46 = int_to_ptr.hbm [resolvable:$true] %s45
      %s47 = sshll.u32 [#allocation5], 4
      %s48 = int_to_ptr.vmem [resolvable:$true] %s47
      %53 = dma.hbm_to_vmem [thread:$0]  %s46, 1024, %s48, [#allocation6], 64, 64, 4
    $region25: #{generator_forward.1} parent=1 // pred_fallthru
      _
    // Predicated region
    $region26: #{generator_forward.1} parent=1 // pred_check
      _
    $region27: #{generator_forward.1} parent=1 // pred_check_branch
      %55 = sbr.rel (0) target = $region29
    $region28: #{generator_forward.1} parent=1 // pred_region
      _
    $region29: #{generator_forward.1} parent=1 // pred_fallthru
      _
    // Predicated region
    $region30: #{generator_forward.1} parent=1 // pred_check
      _
    $region31: #{generator_forward.1} parent=1 // pred_check_branch
      %57 = sbr.rel (0) target = $region33
    $region32: #{generator_forward.1} parent=1 // pred_region
      %59 = vsyncadd [#allocation6], 0
      %s60 = sshll.u32 %s7, 4
      %s61 = int_to_ptr.hbm [resolvable:$true] %s60
      %s62 = sshll.u32 [#allocation7], 4
      %s63 = int_to_ptr.vmem [resolvable:$true] %s62
      %68 = dma.hbm_to_vmem [thread:$0]  %s61, 1024, %s63, [#allocation6], 64, 64, 4
    $region33: #{generator_forward.1} parent=1 // pred_fallthru
      _
    // Predicated region
    $region34: #{generator_forward.1} parent=1 // pred_check
      _
    $region35: #{generator_forward.1} parent=1 // pred_check_branch
      %70 = sbr.rel (0) target = $region37
    $region36: #{generator_forward.1} parent=1 // pred_region
      _
    $region37: #{generator_forward.1} parent=1 // pred_fallthru
      _
    // Predicated region
    $region38: #{generator_forward.1} parent=1 // pred_check
      _
    $region39: #{generator_forward.1} parent=1 // pred_check_branch
      %72 = sbr.rel (0) target = $region41
    $region40: #{generator_forward.1} parent=1 // pred_region
      %74 = vsyncadd [#allocation9], 0
      %s75 = sshll.u32 %s9, 4
      %s76 = int_to_ptr.hbm [resolvable:$true] %s75
      %s77 = sshll.u32 [#allocation8], 4
      %s78 = int_to_ptr.vmem [resolvable:$true] %s77
      %83 = dma.hbm_to_vmem [thread:$0]  %s76, 7168, %s78, [#allocation9], 448, 448, 28
    $region41: #{generator_forward.1} parent=1 // pred_fallthru
      _
    // Predicated region
    $region42: #{generator_forward.1} parent=1 // pred_check
      _
    $region43: #{generator_forward.1} parent=1 // pred_check_branch
      %85 = sbr.rel (0) target = $region45
    $region44: #{generator_forward.1} parent=1 // pred_region
      _
    $region45: #{generator_forward.1} parent=1 // pred_fallthru
      _
    // Predicated region
    $region46: #{generator_forward.1} parent=1 // pred_check
      _
    $region47: #{generator_forward.1} parent=1 // pred_check_branch
      %87 = sbr.rel (0) target = $region49
    $region48: #{generator_forward.1} parent=1 // pred_region
      %89 = dma.done [#allocation3], 1024
    $region49: #{generator_forward.1} parent=1 // pred_fallthru
      _
    // Predicated region
    $region50: #{generator_forward.1} parent=1 // pred_check
      _
    $region51: #{generator_forward.1} parent=1 // pred_check_branch
      %91 = sbr.rel (0) target = $region53
    $region52: #{generator_forward.1} parent=1 // pred_region
      %93 = dma.done [#allocation6], 1024
    $region53: #{generator_forward.1} parent=1 // pred_fallthru
      _
    // Predicated region
    $region54: #{generator_forward.1} parent=1 // pred_check
      _
    $region55: #{generator_forward.1} parent=1 // pred_check_branch
      %95 = sbr.rel (0) target = $region57
    $region56: #{generator_forward.1} parent=1 // pred_region
      %97 = dma.done [#allocation6], 1024
    $region57: #{generator_forward.1} parent=1 // pred_fallthru
      _
    // Predicated region
    $region58: #{generator_forward.1} parent=1 // pred_check
      _
    $region59: #{generator_forward.1} parent=1 // pred_check_branch
      %99 = sbr.rel (0) target = $region61
    $region60: #{generator_forward.1} parent=1 // pred_region
      %101 = dma.done [#allocation9], 7168
    $region61: #{generator_forward.1} parent=1 // pred_fallthru
      _
    %v103 = vld [vmem:[%s0] sm:$0xff]
    %v104 = vpack.c.bf16 %v103, %v103
    %v105 = vld [vmem:[%s1] sm:$0x1]
    %v106 = vld [vmem:[%s2] sm:$0x1]
    %v108 = vperm.slane %v106, 0
    %vm110 = vcmask 15360
    %v112 = vsel %vm110, %v104, 0
    %vm114 = vcmask 1040384
    %v116 = vsel %vm114, %v105, 0
    %118 = vmatpush.bf16.msra.mxu0 0
    %119 = vmatpush.bf16.msra.mxu0 0
    %120 = vmatpush.bf16.msra.mxu0 0
    %121 = vmatpush.bf16.msra.mxu0 0
    %122 = vmatpush.bf16.msra.mxu0 0
    %123 = vmatpush.bf16.msra.mxu0 0
    %124 = vmatpush.bf16.msra.mxu0 0
    %125 = vmatpush.bf16.msra.mxu0 %v116
    %126 = vmatmul.bf16.gmra.mxu0 %v112
    %v127 = vpop.f32.mrf.mxu0
    %v128 = vadd.f32 %v108, %v127
    %v129 = vpop.f32.mrf.mxu0
    %130 = vdwg.mxu0
    %v131 = vmax.f32 %v128, 0.0
    %v132 = vpack.c.bf16 %v131, %v131
    %v133 = vld [vmem:[#allocation2] sm:$0xf]
    %v134 = vld [vmem:[#allocation2 + $0x4] sm:$0xf]
    %v135 = vld [vmem:[#allocation2 + $0x8] sm:$0xf]
    %v136 = vld [vmem:[#allocation2 + $0xc] sm:$0xf]
    %v137 = vld [vmem:[#allocation2 + $0x10] sm:$0xf]
    %v138 = vld [vmem:[#allocation2 + $0x14] sm:$0xf]
    %v139 = vld [vmem:[#allocation2 + $0x18] sm:$0xf]
    %v140 = vld [vmem:[#allocation2 + $0x1c] sm:$0xf]
    %v141 = vld [vmem:[#allocation2 + $0x20] sm:$0xf]
    %v142 = vld [vmem:[#allocation2 + $0x24] sm:$0xf]
    %v143 = vld [vmem:[#allocation2 + $0x28] sm:$0xf]
    %v144 = vld [vmem:[#allocation2 + $0x2c] sm:$0xf]
    %v145 = vld [vmem:[#allocation2 + $0x30] sm:$0xf]
    %v146 = vld [vmem:[#allocation2 + $0x34] sm:$0xf]
    %v147 = vld [vmem:[#allocation2 + $0x38] sm:$0xf]
    %v148 = vld [vmem:[#allocation2 + $0x3c] sm:$0xf]
    %v149 = vld [vmem:[%s4] sm:$0x1]
    %v151 = vperm.slane %v149, 0
    %v169 = vunpack.c.l.b16 %v133
    %v170 = vunpack.c.l.b16 %v134
    %v171 = vunpack.c.l.b16 %v135
    %v172 = vunpack.c.l.b16 %v136
    %v173 = vunpack.c.l.b16 %v137
    %v174 = vunpack.c.l.b16 %v138
    %v175 = vunpack.c.l.b16 %v139
    %v176 = vunpack.c.l.b16 %v140
    %v177 = vunpack.c.l.b16 %v141
    %v178 = vunpack.c.l.b16 %v142
    %v179 = vunpack.c.l.b16 %v143
    %v180 = vunpack.c.l.b16 %v144
    %v181 = vunpack.c.l.b16 %v145
    %v182 = vunpack.c.l.b16 %v146
    %v183 = vunpack.c.l.b16 %v147
    %v184 = vunpack.c.l.b16 %v148
    %v185 = vpack.c.b16 %v170, %v169
    %v186 = vpack.c.b16 %v172, %v171
    %v187 = vpack.c.b16 %v174, %v173
    %v188 = vpack.c.b16 %v176, %v175
    %v189 = vpack.c.b16 %v178, %v177
    %v190 = vpack.c.b16 %v180, %v179
    %v191 = vpack.c.b16 %v182, %v181
    %v192 = vpack.c.b16 %v184, %v183
    %201 = vmatpush.bf16.msra.mxu0 %v192
    %202 = vmatpush.bf16.msra.mxu0 %v191
    %203 = vmatpush.bf16.msra.mxu0 %v190
    %204 = vmatpush.bf16.msra.mxu0 %v189
    %205 = vmatpush.bf16.msra.mxu0 %v188
    %206 = vmatpush.bf16.msra.mxu0 %v187
    %207 = vmatpush.bf16.msra.mxu0 %v186
    %208 = vmatpush.bf16.msra.mxu0 %v185
    %209 = vmatmul.bf16.gmra.mxu0 %v132
    %v210 = vpop.f32.mrf.mxu0
    %v211 = vadd.f32 %v151, %v210
    %v212 = vpop.f32.mrf.mxu0
    %213 = vdwg.mxu0
    %v214 = vmax.f32 %v211, 0.0
    %v215 = vpack.c.bf16 %v214, %v214
    %v216 = vld [vmem:[#allocation5] sm:$0xf]
    %v217 = vld [vmem:[#allocation5 + $0x4] sm:$0xf]
    %v218 = vld [vmem:[#allocation5 + $0x8] sm:$0xf]
    %v219 = vld [vmem:[#allocation5 + $0xc] sm:$0xf]
    %v220 = vld [vmem:[#allocation5 + $0x10] sm:$0xf]
    %v221 = vld [vmem:[#allocation5 + $0x14] sm:$0xf]
    %v222 = vld [vmem:[#allocation5 + $0x18] sm:$0xf]
    %v223 = vld [vmem:[#allocation5 + $0x1c] sm:$0xf]
    %v224 = vld [vmem:[#allocation5 + $0x20] sm:$0xf]
    %v225 = vld [vmem:[#allocation5 + $0x24] sm:$0xf]
    %v226 = vld [vmem:[#allocation5 + $0x28] sm:$0xf]
    %v227 = vld [vmem:[#allocation5 + $0x2c] sm:$0xf]
    %v228 = vld [vmem:[#allocation5 + $0x30] sm:$0xf]
    %v229 = vld [vmem:[#allocation5 + $0x34] sm:$0xf]
    %v230 = vld [vmem:[#allocation5 + $0x38] sm:$0xf]
    %v231 = vld [vmem:[#allocation5 + $0x3c] sm:$0xf]
    %v232 = vld [vmem:[%s6] sm:$0x1]
    %v234 = vperm.slane %v232, 0
    %v252 = vunpack.c.l.b16 %v216
    %v253 = vunpack.c.l.b16 %v217
    %v254 = vunpack.c.l.b16 %v218
    %v255 = vunpack.c.l.b16 %v219
    %v256 = vunpack.c.l.b16 %v220
    %v257 = vunpack.c.l.b16 %v221
    %v258 = vunpack.c.l.b16 %v222
    %v259 = vunpack.c.l.b16 %v223
    %v260 = vunpack.c.l.b16 %v224
    %v261 = vunpack.c.l.b16 %v225
    %v262 = vunpack.c.l.b16 %v226
    %v263 = vunpack.c.l.b16 %v227
    %v264 = vunpack.c.l.b16 %v228
    %v265 = vunpack.c.l.b16 %v229
    %v266 = vunpack.c.l.b16 %v230
    %v267 = vunpack.c.l.b16 %v231
    %v268 = vpack.c.b16 %v253, %v252
    %v269 = vpack.c.b16 %v255, %v254
    %v270 = vpack.c.b16 %v257, %v256
    %v271 = vpack.c.b16 %v259, %v258
    %v272 = vpack.c.b16 %v261, %v260
    %v273 = vpack.c.b16 %v263, %v262
    %v274 = vpack.c.b16 %v265, %v264
    %v275 = vpack.c.b16 %v267, %v266
    %284 = vmatpush.bf16.msra.mxu0 %v275
    %285 = vmatpush.bf16.msra.mxu0 %v274
    %286 = vmatpush.bf16.msra.mxu0 %v273
    %287 = vmatpush.bf16.msra.mxu0 %v272
    %288 = vmatpush.bf16.msra.mxu0 %v271
    %289 = vmatpush.bf16.msra.mxu0 %v270
    %290 = vmatpush.bf16.msra.mxu0 %v269
    %291 = vmatpush.bf16.msra.mxu0 %v268
    %292 = vmatmul.bf16.gmra.mxu0 %v215
    %v293 = vpop.f32.mrf.mxu0
    %v294 = vadd.f32 %v234, %v293
    %v295 = vpop.f32.mrf.mxu0
    %296 = vdwg.mxu0
    %v297 = vmax.f32 %v294, 0.0
    %v298 = vpack.c.bf16 %v297, %v297
    %v299 = vld [vmem:[#allocation7] sm:$0xf]
    %v300 = vld [vmem:[#allocation7 + $0x4] sm:$0xf]
    %v301 = vld [vmem:[#allocation7 + $0x8] sm:$0xf]
    %v302 = vld [vmem:[#allocation7 + $0xc] sm:$0xf]
    %v303 = vld [vmem:[#allocation7 + $0x10] sm:$0xf]
    %v304 = vld [vmem:[#allocation7 + $0x14] sm:$0xf]
    %v305 = vld [vmem:[#allocation7 + $0x18] sm:$0xf]
    %v306 = vld [vmem:[#allocation7 + $0x1c] sm:$0xf]
    %v307 = vld [vmem:[#allocation7 + $0x20] sm:$0xf]
    %v308 = vld [vmem:[#allocation7 + $0x24] sm:$0xf]
    %v309 = vld [vmem:[#allocation7 + $0x28] sm:$0xf]
    %v310 = vld [vmem:[#allocation7 + $0x2c] sm:$0xf]
    %v311 = vld [vmem:[#allocation7 + $0x30] sm:$0xf]
    %v312 = vld [vmem:[#allocation7 + $0x34] sm:$0xf]
    %v313 = vld [vmem:[#allocation7 + $0x38] sm:$0xf]
    %v314 = vld [vmem:[#allocation7 + $0x3c] sm:$0xf]
    %v315 = vld [vmem:[%s8] sm:$0x1]
    %v317 = vperm.slane %v315, 0
    %v335 = vunpack.c.l.b16 %v299
    %v336 = vunpack.c.l.b16 %v300
    %v337 = vunpack.c.l.b16 %v301
    %v338 = vunpack.c.l.b16 %v302
    %v339 = vunpack.c.l.b16 %v303
    %v340 = vunpack.c.l.b16 %v304
    %v341 = vunpack.c.l.b16 %v305
    %v342 = vunpack.c.l.b16 %v306
    %v343 = vunpack.c.l.b16 %v307
    %v344 = vunpack.c.l.b16 %v308
    %v345 = vunpack.c.l.b16 %v309
    %v346 = vunpack.c.l.b16 %v310
    %v347 = vunpack.c.l.b16 %v311
    %v348 = vunpack.c.l.b16 %v312
    %v349 = vunpack.c.l.b16 %v313
    %v350 = vunpack.c.l.b16 %v314
    %v351 = vpack.c.b16 %v336, %v335
    %v352 = vpack.c.b16 %v338, %v337
    %v353 = vpack.c.b16 %v340, %v339
    %v354 = vpack.c.b16 %v342, %v341
    %v355 = vpack.c.b16 %v344, %v343
    %v356 = vpack.c.b16 %v346, %v345
    %v357 = vpack.c.b16 %v348, %v347
    %v358 = vpack.c.b16 %v350, %v349
    %367 = vmatpush.bf16.msra.mxu0 %v358
    %368 = vmatpush.bf16.msra.mxu0 %v357
    %369 = vmatpush.bf16.msra.mxu0 %v356
    %370 = vmatpush.bf16.msra.mxu0 %v355
    %371 = vmatpush.bf16.msra.mxu0 %v354
    %372 = vmatpush.bf16.msra.mxu0 %v353
    %373 = vmatpush.bf16.msra.mxu0 %v352
    %374 = vmatpush.bf16.msra.mxu0 %v351
    %375 = vmatmul.bf16.gmra.mxu0 %v298
    %v376 = vpop.f32.mrf.mxu0
    %v377 = vadd.f32 %v317, %v376
    %v378 = vpop.f32.mrf.mxu0
    %379 = vdwg.mxu0
    %v380 = vmax.f32 %v377, 0.0
    %v381 = vpack.c.bf16 %v380, %v380
    %v382 = vld [vmem:[#allocation8] sm:$0xff]
    %v383 = vld [vmem:[#allocation8 + $0x8] sm:$0xff]
    %v384 = vld [vmem:[#allocation8 + $0x10] sm:$0xff]
    %v385 = vld [vmem:[#allocation8 + $0x18] sm:$0xf]
    %v386 = vld [vmem:[#allocation8 + $0x1c] sm:$0xff]
    %v387 = vld [vmem:[#allocation8 + $0x24] sm:$0xff]
    %v388 = vld [vmem:[#allocation8 + $0x2c] sm:$0xff]
    %v389 = vld [vmem:[#allocation8 + $0x34] sm:$0xf]
    %v390 = vld [vmem:[#allocation8 + $0x38] sm:$0xff]
    %v391 = vld [vmem:[#allocation8 + $0x40] sm:$0xff]
    %v392 = vld [vmem:[#allocation8 + $0x48] sm:$0xff]
    %v393 = vld [vmem:[#allocation8 + $0x50] sm:$0xf]
    %v394 = vld [vmem:[#allocation8 + $0x54] sm:$0xff]
    %v395 = vld [vmem:[#allocation8 + $0x5c] sm:$0xff]
    %v396 = vld [vmem:[#allocation8 + $0x64] sm:$0xff]
    %v397 = vld [vmem:[#allocation8 + $0x6c] sm:$0xf]
    %v398 = vld [vmem:[#allocation8 + $0x70] sm:$0xff]
    %v399 = vld [vmem:[#allocation8 + $0x78] sm:$0xff]
    %v400 = vld [vmem:[#allocation8 + $0x80] sm:$0xff]
    %v401 = vld [vmem:[#allocation8 + $0x88] sm:$0xf]
    %v402 = vld [vmem:[#allocation8 + $0x8c] sm:$0xff]
    %v403 = vld [vmem:[#allocation8 + $0x94] sm:$0xff]
    %v404 = vld [vmem:[#allocation8 + $0x9c] sm:$0xff]
    %v405 = vld [vmem:[#allocation8 + $0xa4] sm:$0xf]
    %v406 = vld [vmem:[#allocation8 + $0xa8] sm:$0xff]
    %v407 = vld [vmem:[#allocation8 + $0xb0] sm:$0xff]
    %v408 = vld [vmem:[#allocation8 + $0xb8] sm:$0xff]
    %v409 = vld [vmem:[#allocation8 + $0xc0] sm:$0xf]
    %v410 = vld [vmem:[#allocation8 + $0xc4] sm:$0xff]
    %v411 = vld [vmem:[#allocation8 + $0xcc] sm:$0xff]
    %v412 = vld [vmem:[#allocation8 + $0xd4] sm:$0xff]
    %v413 = vld [vmem:[#allocation8 + $0xdc] sm:$0xf]
    %v414 = vld [vmem:[#allocation8 + $0xe0] sm:$0xff]
    %v415 = vld [vmem:[#allocation8 + $0xe8] sm:$0xff]
    %v416 = vld [vmem:[#allocation8 + $0xf0] sm:$0xff]
    %v417 = vld [vmem:[#allocation8 + $0xf8] sm:$0xf]
    %v418 = vld [vmem:[#allocation8 + $0xfc] sm:$0xff]
    %v419 = vld [vmem:[#allocation8 + $0x104] sm:$0xff]
    %v420 = vld [vmem:[#allocation8 + $0x10c] sm:$0xff]
    %v421 = vld [vmem:[#allocation8 + $0x114] sm:$0xf]
    %v422 = vld [vmem:[#allocation8 + $0x118] sm:$0xff]
    %v423 = vld [vmem:[#allocation8 + $0x120] sm:$0xff]
    %v424 = vld [vmem:[#allocation8 + $0x128] sm:$0xff]
    %v425 = vld [vmem:[#allocation8 + $0x130] sm:$0xf]
    %v426 = vld [vmem:[#allocation8 + $0x134] sm:$0xff]
    %v427 = vld [vmem:[#allocation8 + $0x13c] sm:$0xff]
    %v428 = vld [vmem:[#allocation8 + $0x144] sm:$0xff]
    %v429 = vld [vmem:[#allocation8 + $0x14c] sm:$0xf]
    %v430 = vld [vmem:[#allocation8 + $0x150] sm:$0xff]
    %v431 = vld [vmem:[#allocation8 + $0x158] sm:$0xff]
    %v432 = vld [vmem:[#allocation8 + $0x160] sm:$0xff]
    %v433 = vld [vmem:[#allocation8 + $0x168] sm:$0xf]
    %v434 = vld [vmem:[#allocation8 + $0x16c] sm:$0xff]
    %v435 = vld [vmem:[#allocation8 + $0x174] sm:$0xff]
    %v436 = vld [vmem:[#allocation8 + $0x17c] sm:$0xff]
    %v437 = vld [vmem:[#allocation8 + $0x184] sm:$0xf]
    %v438 = vld [vmem:[#allocation8 + $0x188] sm:$0xff]
    %v439 = vld [vmem:[#allocation8 + $0x190] sm:$0xff]
    %v440 = vld [vmem:[#allocation8 + $0x198] sm:$0xff]
    %v441 = vld [vmem:[#allocation8 + $0x1a0] sm:$0xf]
    %v442 = vld [vmem:[#allocation8 + $0x1a4] sm:$0xff]
    %v443 = vld [vmem:[#allocation8 + $0x1ac] sm:$0xff]
    %v444 = vld [vmem:[#allocation8 + $0x1b4] sm:$0xff]
    %v445 = vld [vmem:[#allocation8 + $0x1bc] sm:$0xf]
    %v446 = vld [vmem:[%s10] sm:$0xff]
    %v448 = vperm.slane %v446, 0
    %v449 = vperm.slane %v446, 1
    %v450 = vperm.slane %v446, 2
    %v451 = vperm.slane %v446, 3
    %v452 = vperm.slane %v446, 4
    %v453 = vperm.slane %v446, 5
    %v454 = vperm.slane %v446, 6
    %v526 = vunpack.c.l.b16 %v382
    %v527 = vunpack.c.h.b16 %v382
    %v528 = vunpack.c.l.b16 %v383
    %v529 = vunpack.c.h.b16 %v383
    %v530 = vunpack.c.l.b16 %v384
    %v531 = vunpack.c.h.b16 %v384
    %v532 = vunpack.c.l.b16 %v385
    %v533 = vunpack.c.l.b16 %v386
    %v534 = vunpack.c.h.b16 %v386
    %v535 = vunpack.c.l.b16 %v387
    %v536 = vunpack.c.h.b16 %v387
    %v537 = vunpack.c.l.b16 %v388
    %v538 = vunpack.c.h.b16 %v388
    %v539 = vunpack.c.l.b16 %v389
    %v540 = vunpack.c.l.b16 %v390
    %v541 = vunpack.c.h.b16 %v390
    %v542 = vunpack.c.l.b16 %v391
    %v543 = vunpack.c.h.b16 %v391
    %v544 = vunpack.c.l.b16 %v392
    %v545 = vunpack.c.h.b16 %v392
    %v546 = vunpack.c.l.b16 %v393
    %v547 = vunpack.c.l.b16 %v394
    %v548 = vunpack.c.h.b16 %v394
    %v549 = vunpack.c.l.b16 %v395
    %v550 = vunpack.c.h.b16 %v395
    %v551 = vunpack.c.l.b16 %v396
    %v552 = vunpack.c.h.b16 %v396
    %v553 = vunpack.c.l.b16 %v397
    %v554 = vunpack.c.l.b16 %v398
    %v555 = vunpack.c.h.b16 %v398
    %v556 = vunpack.c.l.b16 %v399
    %v557 = vunpack.c.h.b16 %v399
    %v558 = vunpack.c.l.b16 %v400
    %v559 = vunpack.c.h.b16 %v400
    %v560 = vunpack.c.l.b16 %v401
    %v561 = vunpack.c.l.b16 %v402
    %v562 = vunpack.c.h.b16 %v402
    %v563 = vunpack.c.l.b16 %v403
    %v564 = vunpack.c.h.b16 %v403
    %v565 = vunpack.c.l.b16 %v404
    %v566 = vunpack.c.h.b16 %v404
    %v567 = vunpack.c.l.b16 %v405
    %v568 = vunpack.c.l.b16 %v406
    %v569 = vunpack.c.h.b16 %v406
    %v570 = vunpack.c.l.b16 %v407
    %v571 = vunpack.c.h.b16 %v407
    %v572 = vunpack.c.l.b16 %v408
    %v573 = vunpack.c.h.b16 %v408
    %v574 = vunpack.c.l.b16 %v409
    %v575 = vunpack.c.l.b16 %v410
    %v576 = vunpack.c.h.b16 %v410
    %v577 = vunpack.c.l.b16 %v411
    %v578 = vunpack.c.h.b16 %v411
    %v579 = vunpack.c.l.b16 %v412
    %v580 = vunpack.c.h.b16 %v412
    %v581 = vunpack.c.l.b16 %v413
    %v582 = vunpack.c.l.b16 %v414
    %v583 = vunpack.c.h.b16 %v414
    %v584 = vunpack.c.l.b16 %v415
    %v585 = vunpack.c.h.b16 %v415
    %v586 = vunpack.c.l.b16 %v416
    %v587 = vunpack.c.h.b16 %v416
    %v588 = vunpack.c.l.b16 %v417
    %v589 = vunpack.c.l.b16 %v418
    %v590 = vunpack.c.h.b16 %v418
    %v591 = vunpack.c.l.b16 %v419
    %v592 = vunpack.c.h.b16 %v419
    %v593 = vunpack.c.l.b16 %v420
    %v594 = vunpack.c.h.b16 %v420
    %v595 = vunpack.c.l.b16 %v421
    %v596 = vunpack.c.l.b16 %v422
    %v597 = vunpack.c.h.b16 %v422
    %v598 = vunpack.c.l.b16 %v423
    %v599 = vunpack.c.h.b16 %v423
    %v600 = vunpack.c.l.b16 %v424
    %v601 = vunpack.c.h.b16 %v424
    %v602 = vunpack.c.l.b16 %v425
    %v603 = vunpack.c.l.b16 %v426
    %v604 = vunpack.c.h.b16 %v426
    %v605 = vunpack.c.l.b16 %v427
    %v606 = vunpack.c.h.b16 %v427
    %v607 = vunpack.c.l.b16 %v428
    %v608 = vunpack.c.h.b16 %v428
    %v609 = vunpack.c.l.b16 %v429
    %v610 = vunpack.c.l.b16 %v430
    %v611 = vunpack.c.h.b16 %v430
    %v612 = vunpack.c.l.b16 %v431
    %v613 = vunpack.c.h.b16 %v431
    %v614 = vunpack.c.l.b16 %v432
    %v615 = vunpack.c.h.b16 %v432
    %v616 = vunpack.c.l.b16 %v433
    %v617 = vunpack.c.l.b16 %v434
    %v618 = vunpack.c.h.b16 %v434
    %v619 = vunpack.c.l.b16 %v435
    %v620 = vunpack.c.h.b16 %v435
    %v621 = vunpack.c.l.b16 %v436
    %v622 = vunpack.c.h.b16 %v436
    %v623 = vunpack.c.l.b16 %v437
    %v624 = vunpack.c.l.b16 %v438
    %v625 = vunpack.c.h.b16 %v438
    %v626 = vunpack.c.l.b16 %v439
    %v627 = vunpack.c.h.b16 %v439
    %v628 = vunpack.c.l.b16 %v440
    %v629 = vunpack.c.h.b16 %v440
    %v630 = vunpack.c.l.b16 %v441
    %v631 = vunpack.c.l.b16 %v442
    %v632 = vunpack.c.h.b16 %v442
    %v633 = vunpack.c.l.b16 %v443
    %v634 = vunpack.c.h.b16 %v443
    %v635 = vunpack.c.l.b16 %v444
    %v636 = vunpack.c.h.b16 %v444
    %v637 = vunpack.c.l.b16 %v445
    %v638 = vpack.c.b16 %v533, %v526
    %v639 = vpack.c.b16 %v534, %v527
    %v640 = vpack.c.b16 %v535, %v528
    %v641 = vpack.c.b16 %v536, %v529
    %v642 = vpack.c.b16 %v537, %v530
    %v643 = vpack.c.b16 %v538, %v531
    %v644 = vpack.c.b16 %v539, %v532
    %v645 = vpack.c.b16 %v547, %v540
    %v646 = vpack.c.b16 %v548, %v541
    %v647 = vpack.c.b16 %v549, %v542
    %v648 = vpack.c.b16 %v550, %v543
    %v649 = vpack.c.b16 %v551, %v544
    %v650 = vpack.c.b16 %v552, %v545
    %v651 = vpack.c.b16 %v553, %v546
    %v652 = vpack.c.b16 %v561, %v554
    %v653 = vpack.c.b16 %v562, %v555
    %v654 = vpack.c.b16 %v563, %v556
    %v655 = vpack.c.b16 %v564, %v557
    %v656 = vpack.c.b16 %v565, %v558
    %v657 = vpack.c.b16 %v566, %v559
    %v658 = vpack.c.b16 %v567, %v560
    %v659 = vpack.c.b16 %v575, %v568
    %v660 = vpack.c.b16 %v576, %v569
    %v661 = vpack.c.b16 %v577, %v570
    %v662 = vpack.c.b16 %v578, %v571
    %v663 = vpack.c.b16 %v579, %v572
    %v664 = vpack.c.b16 %v580, %v573
    %v665 = vpack.c.b16 %v581, %v574
    %v666 = vpack.c.b16 %v589, %v582
    %v667 = vpack.c.b16 %v590, %v583
    %v668 = vpack.c.b16 %v591, %v584
    %v669 = vpack.c.b16 %v592, %v585
    %v670 = vpack.c.b16 %v593, %v586
    %v671 = vpack.c.b16 %v594, %v587
    %v672 = vpack.c.b16 %v595, %v588
    %v673 = vpack.c.b16 %v603, %v596
    %v674 = vpack.c.b16 %v604, %v597
    %v675 = vpack.c.b16 %v605, %v598
    %v676 = vpack.c.b16 %v606, %v599
    %v677 = vpack.c.b16 %v607, %v600
    %v678 = vpack.c.b16 %v608, %v601
    %v679 = vpack.c.b16 %v609, %v602
    %v680 = vpack.c.b16 %v617, %v610
    %v681 = vpack.c.b16 %v618, %v611
    %v682 = vpack.c.b16 %v619, %v612
    %v683 = vpack.c.b16 %v620, %v613
    %v684 = vpack.c.b16 %v621, %v614
    %v685 = vpack.c.b16 %v622, %v615
    %v686 = vpack.c.b16 %v623, %v616
    %v687 = vpack.c.b16 %v631, %v624
    %v688 = vpack.c.b16 %v632, %v625
    %v689 = vpack.c.b16 %v633, %v626
    %v690 = vpack.c.b16 %v634, %v627
    %v691 = vpack.c.b16 %v635, %v628
    %v692 = vpack.c.b16 %v636, %v629
    %v693 = vpack.c.b16 %v637, %v630
    %750 = vmatpush.bf16.msra.mxu0 %v687
    %751 = vmatpush.bf16.msra.mxu0 %v680
    %752 = vmatpush.bf16.msra.mxu0 %v673
    %753 = vmatpush.bf16.msra.mxu0 %v666
    %754 = vmatpush.bf16.msra.mxu0 %v659
    %755 = vmatpush.bf16.msra.mxu0 %v652
    %756 = vmatpush.bf16.msra.mxu0 %v645
    %757 = vmatpush.bf16.msra.mxu0 %v638
    %758 = vmatmul.bf16.gmra.mxu0 %v381
    %v759 = vpop.f32.mrf.mxu0
    %v760 = vadd.f32 %v448, %v759
    %v761 = vpop.f32.mrf.mxu0
    %762 = vdwg.mxu0
    %763 = vmatpush.bf16.msra.mxu0 %v688
    %764 = vmatpush.bf16.msra.mxu0 %v681
    %765 = vmatpush.bf16.msra.mxu0 %v674
    %766 = vmatpush.bf16.msra.mxu0 %v667
    %767 = vmatpush.bf16.msra.mxu0 %v660
    %768 = vmatpush.bf16.msra.mxu0 %v653
    %769 = vmatpush.bf16.msra.mxu0 %v646
    %770 = vmatpush.bf16.msra.mxu0 %v639
    %771 = vmatmul.bf16.gmra.mxu0 %v381
    %v772 = vpop.f32.mrf.mxu0
    %v773 = vadd.f32 %v449, %v772
    %v774 = vpop.f32.mrf.mxu0
    %775 = vdwg.mxu0
    %776 = vmatpush.bf16.msra.mxu0 %v689
    %777 = vmatpush.bf16.msra.mxu0 %v682
    %778 = vmatpush.bf16.msra.mxu0 %v675
    %779 = vmatpush.bf16.msra.mxu0 %v668
    %780 = vmatpush.bf16.msra.mxu0 %v661
    %781 = vmatpush.bf16.msra.mxu0 %v654
    %782 = vmatpush.bf16.msra.mxu0 %v647
    %783 = vmatpush.bf16.msra.mxu0 %v640
    %784 = vmatmul.bf16.gmra.mxu0 %v381
    %v785 = vpop.f32.mrf.mxu0
    %v786 = vadd.f32 %v450, %v785
    %v787 = vpop.f32.mrf.mxu0
    %788 = vdwg.mxu0
    %789 = vmatpush.bf16.msra.mxu0 %v690
    %790 = vmatpush.bf16.msra.mxu0 %v683
    %791 = vmatpush.bf16.msra.mxu0 %v676
    %792 = vmatpush.bf16.msra.mxu0 %v669
    %793 = vmatpush.bf16.msra.mxu0 %v662
    %794 = vmatpush.bf16.msra.mxu0 %v655
    %795 = vmatpush.bf16.msra.mxu0 %v648
    %796 = vmatpush.bf16.msra.mxu0 %v641
    %797 = vmatmul.bf16.gmra.mxu0 %v381
    %v798 = vpop.f32.mrf.mxu0
    %v799 = vadd.f32 %v451, %v798
    %v800 = vpop.f32.mrf.mxu0
    %801 = vdwg.mxu0
    %802 = vmatpush.bf16.msra.mxu0 %v691
    %803 = vmatpush.bf16.msra.mxu0 %v684
    %804 = vmatpush.bf16.msra.mxu0 %v677
    %805 = vmatpush.bf16.msra.mxu0 %v670
    %806 = vmatpush.bf16.msra.mxu0 %v663
    %807 = vmatpush.bf16.msra.mxu0 %v656
    %808 = vmatpush.bf16.msra.mxu0 %v649
    %809 = vmatpush.bf16.msra.mxu0 %v642
    %810 = vmatmul.bf16.gmra.mxu0 %v381
    %v811 = vpop.f32.mrf.mxu0
    %v812 = vadd.f32 %v452, %v811
    %v813 = vpop.f32.mrf.mxu0
    %814 = vdwg.mxu0
    %815 = vmatpush.bf16.msra.mxu0 %v692
    %816 = vmatpush.bf16.msra.mxu0 %v685
    %817 = vmatpush.bf16.msra.mxu0 %v678
    %818 = vmatpush.bf16.msra.mxu0 %v671
    %819 = vmatpush.bf16.msra.mxu0 %v664
    %820 = vmatpush.bf16.msra.mxu0 %v657
    %821 = vmatpush.bf16.msra.mxu0 %v650
    %822 = vmatpush.bf16.msra.mxu0 %v643
    %823 = vmatmul.bf16.gmra.mxu0 %v381
    %v824 = vpop.f32.mrf.mxu0
    %v825 = vadd.f32 %v453, %v824
    %v826 = vpop.f32.mrf.mxu0
    %827 = vdwg.mxu0
    %828 = vmatpush.bf16.msra.mxu0 %v693
    %829 = vmatpush.bf16.msra.mxu0 %v686
    %830 = vmatpush.bf16.msra.mxu0 %v679
    %831 = vmatpush.bf16.msra.mxu0 %v672
    %832 = vmatpush.bf16.msra.mxu0 %v665
    %833 = vmatpush.bf16.msra.mxu0 %v658
    %834 = vmatpush.bf16.msra.mxu0 %v651
    %835 = vmatpush.bf16.msra.mxu0 %v644
    %836 = vmatmul.bf16.gmra.mxu0 %v381
    %v837 = vpop.f32.mrf.mxu0
    %v838 = vadd.f32 %v454, %v837
    %v839 = vpop.f32.mrf.mxu0
    %840 = vdwg.mxu0
    %841 = vst [vmem:[#allocation10] sm:$0xff] %v760
    %842 = vst [vmem:[#allocation10 + $0x8] sm:$0xff] %v773
    %843 = vst [vmem:[#allocation10 + $0x10] sm:$0xff] %v786
    %844 = vst [vmem:[#allocation10 + $0x18] sm:$0xff] %v799
    %845 = vst [vmem:[#allocation10 + $0x20] sm:$0xff] %v812
    %846 = vst [vmem:[#allocation10 + $0x28] sm:$0xff] %v825
    %847 = vst [vmem:[#allocation10 + $0x30] sm:$0xff] %v838
    // Predicated region
    $region62: #{generator_forward.1} parent=1 // pred_check
      _
    $region63: #{generator_forward.1} parent=1 // pred_check_branch
      %849 = sbr.rel (0) target = $region65
    $region64: #{generator_forward.1} parent=1 // pred_region
      %851 = vsyncadd [#allocation4], 0
      %s853 = sshll.u32 [#allocation10], 4
      %s854 = int_to_ptr.vmem [resolvable:$true] %s853
      %s855 = sshll.u32 %s11, 4
      %s856 = int_to_ptr.hbm [resolvable:$true] %s855
      %858 = dma.vmem_to_hbm [thread:$0]  %s854, 896, %s856, [#allocation4]
    $region65: #{generator_forward.1} parent=1 // pred_fallthru
      _
    // Predicated region
    $region66: #{generator_forward.1} parent=1 // pred_check
      _
    $region67: #{generator_forward.1} parent=1 // pred_check_branch
      %860 = sbr.rel (0) target = $region69
    $region68: #{generator_forward.1} parent=1 // pred_region
      %862 = dma.done [#allocation4], 896
    $region69: #{generator_forward.1} parent=1 // pred_fallthru
      _
    %863 = vsyncpa [#allocation3], 1
    %864 = vsyncpa [#allocation6], 1
    %865 = vsyncpa [#allocation9], 1
    %866 = vsyncpa [#allocation4], 1

</llo_original>
